<compile_context>
chip_gen: v6e
topology: v6e:2x2x1
jax: 0.10.0
libtpu: 0.0.40
codegen_flags: <defaults>
</compile_context>

<pallas_src>
import functools

import jax
import jax.numpy as jnp
from jax.experimental import pallas as pl
from jax.experimental.pallas import tpu as pltpu

NEG_SLOPE = 0.2            # LeakyReLU(0.2)
BN_EPS = 1e-5              # nn.BatchNorm2d default eps
LANE = 128                 # lane width: pad Cout to a multiple of this
VMEM_LIMIT = 48 * 1024 * 1024  # safe on v5e/v6e (128 MiB) and v7x (64 MiB)


def _round_up(x, m):
    return (x + m - 1) // m * m


def _choose_tm(m):
    """M tile: 256 rows when possible, else the (sublane-aligned) full extent."""
    return 256 if m >= 256 else _round_up(m, 8)


# ----------------------------------------------------------------------------
# Pallas kernels
# ----------------------------------------------------------------------------
def _conv_bias_act_kernel(x_ref, w_ref, b_ref, o_ref, *, apply_act):
    """(tm,K)@(K,Cp) + bias, optional fused LeakyReLU. Non-BN layers."""
    acc = jnp.dot(x_ref[...], w_ref[...], preferred_element_type=jnp.float32)
    acc = acc + b_ref[...]
    if apply_act:
        acc = jnp.where(acc >= 0, acc, NEG_SLOPE * acc)
    o_ref[...] = acc.astype(o_ref.dtype)


def _conv_stats_kernel(x_ref, w_ref, o_ref, sum_ref, sq_ref):
    """(tm,K)@(K,Cp) (no bias) + fused per-channel sum / sum-of-squares.

    sum_ref / sq_ref use a constant index_map, so they stay resident in VMEM
    across the (sequential, 'arbitrary') M grid and act as accumulators.
    """
    acc = jnp.dot(x_ref[...], w_ref[...], preferred_element_type=jnp.float32)

    @pl.when(pl.program_id(0) == 0)
    def _():
        sum_ref[...] = jnp.zeros_like(sum_ref)
        sq_ref[...] = jnp.zeros_like(sq_ref)

    sum_ref[...] += jnp.sum(acc, axis=0, keepdims=True)
    sq_ref[...] += jnp.sum(acc * acc, axis=0, keepdims=True)
    o_ref[...] = acc.astype(o_ref.dtype)


def _affine_act_kernel(x_ref, scale_ref, shift_ref, o_ref):
    """y = LeakyReLU(x * scale + shift), per-channel scale/shift (f32 math)."""
    y = x_ref[...].astype(jnp.float32) * scale_ref[...] + shift_ref[...]
    y = jnp.where(y >= 0, y, NEG_SLOPE * y)
    o_ref[...] = y.astype(o_ref.dtype)


# ----------------------------------------------------------------------------
# pallas_call wrappers
# ----------------------------------------------------------------------------
def conv_matmul_bias_act(cols, w, b, *, apply_act, tm):
    """Conv (as matmul) + bias + optional LeakyReLU, tiled over M (parallel)."""
    Mp, K = cols.shape
    _, Cp = w.shape
    grid = (Mp // tm,)
    return pl.pallas_call(
        functools.partial(_conv_bias_act_kernel, apply_act=apply_act),
        out_shape=jax.ShapeDtypeStruct((Mp, Cp), jnp.bfloat16),
        grid_spec=pltpu.PrefetchScalarGridSpec(
            num_scalar_prefetch=0,
            grid=grid,
            in_specs=[
                pl.BlockSpec((tm, K), lambda i: (i, 0)),
                pl.BlockSpec((K, Cp), lambda i: (0, 0)),   # weight resident
                pl.BlockSpec((1, Cp), lambda i: (0, 0)),
            ],
            out_specs=pl.BlockSpec((tm, Cp), lambda i: (i, 0)),
        ),
        compiler_params=pltpu.CompilerParams(
            dimension_semantics=("parallel",),
            vmem_limit_bytes=VMEM_LIMIT),
    )(cols, w, b)


def conv_matmul_stats(cols, w, *, tm):
    """Conv (as matmul, no bias) + fused per-channel sum / sumsq reduction."""
    Mp, K = cols.shape
    _, Cp = w.shape
    grid = (Mp // tm,)
    return pl.pallas_call(
        _conv_stats_kernel,
        out_shape=(jax.ShapeDtypeStruct((Mp, Cp), jnp.bfloat16),
                   jax.ShapeDtypeStruct((1, Cp), jnp.float32),
                   jax.ShapeDtypeStruct((1, Cp), jnp.float32)),
        grid_spec=pltpu.PrefetchScalarGridSpec(
            num_scalar_prefetch=0,
            grid=grid,
            in_specs=[
                pl.BlockSpec((tm, K), lambda i: (i, 0)),
                pl.BlockSpec((K, Cp), lambda i: (0, 0)),   # weight resident
            ],
            out_specs=(pl.BlockSpec((tm, Cp), lambda i: (i, 0)),
                       pl.BlockSpec((1, Cp), lambda i: (0, 0)),   # accumulator
                       pl.BlockSpec((1, Cp), lambda i: (0, 0))),  # accumulator
        ),
        compiler_params=pltpu.CompilerParams(
            # M axis carries the stats accumulators -> must be sequential.
            dimension_semantics=("arbitrary",),
            vmem_limit_bytes=VMEM_LIMIT),
    )(cols, w)


def affine_act(x2d, scale, shift, *, tm):
    """y = LeakyReLU(x * scale + shift), tiled over M (parallel)."""
    Mp, Cp = x2d.shape
    grid = (Mp // tm,)
    return pl.pallas_call(
        _affine_act_kernel,
        out_shape=jax.ShapeDtypeStruct((Mp, Cp), jnp.bfloat16),
        grid_spec=pltpu.PrefetchScalarGridSpec(
            num_scalar_prefetch=0,
            grid=grid,
            in_specs=[pl.BlockSpec((tm, Cp), lambda i: (i, 0)),
                      pl.BlockSpec((1, Cp), lambda i: (0, 0)),
                      pl.BlockSpec((1, Cp), lambda i: (0, 0))],
            out_specs=pl.BlockSpec((tm, Cp), lambda i: (i, 0)),
        ),
        compiler_params=pltpu.CompilerParams(
            dimension_semantics=("parallel",),
            vmem_limit_bytes=VMEM_LIMIT),
    )(x2d, scale, shift)


# ----------------------------------------------------------------------------
# JAX glue: im2col, BN scale/shift, layer specs, forward pass, params
# ----------------------------------------------------------------------------
def im2col(x_nhwc, k, stride, pad):
    N, H, W, C = x_nhwc.shape
    xp = jnp.pad(x_nhwc, ((0, 0), (pad, pad), (pad, pad), (0, 0)))
    Ho = (H + 2 * pad - k) // stride + 1
    Wo = (W + 2 * pad - k) // stride + 1
    cols = []
    for kh in range(k):
        for kw in range(k):
            cols.append(xp[:, kh:kh + stride * Ho:stride,
                           kw:kw + stride * Wo:stride, :])
    patches = jnp.concatenate(cols, axis=-1)          # (N, Ho, Wo, k*k*C)
    return patches.reshape(N * Ho * Wo, k * k * C), N, Ho, Wo


def bn_scale_shift(ssum, ssq, gamma, beta, m_rows):
    """Training-mode BatchNorm stats -> per-channel scale/shift (tiny f32 math)."""
    mean = ssum / m_rows
    var = jnp.maximum(ssq / m_rows - mean * mean, 0.0)   # clamp cancellation
    scale = gamma * jax.lax.rsqrt(var + BN_EPS)
    shift = beta - mean * scale
    return scale, shift


def build_layer_specs(input_nc, ndf, n_layers):
    """Mirrors NLayerDiscriminator.__init__ (norm_layer = BatchNorm2d)."""
    use_bias = False  # norm_layer == nn.InstanceNorm2d is False for BatchNorm2d
    specs = [dict(cin=input_nc, cout=ndf, stride=2, bias=True, bn=False, act=True)]
    nf_mult = 1
    for n in range(1, n_layers):
        nf_prev = nf_mult
        nf_mult = min(2 ** n, 88)   # matches the given module source exactly
        specs.append(dict(cin=ndf * nf_prev, cout=ndf * nf_mult, stride=2,
                          bias=use_bias, bn=True, act=True))
    nf_prev = nf_mult
    nf_mult = min(2 ** n_layers, 8)
    specs.append(dict(cin=ndf * nf_prev, cout=ndf * nf_mult, stride=1,
                      bias=use_bias, bn=True, act=True))
    specs.append(dict(cin=ndf * nf_mult, cout=1, stride=1,
                      bias=True, bn=False, act=False))
    return specs


def init_params(key, specs):
    params = {}
    for i, s in enumerate(specs):
        key, kw_, kb_, kg_, kbe_ = jax.random.split(key, 5)
        cin, cout = s["cin"], s["cout"]
        cpad = _round_up(cout, LANE)
        fan_in = 16 * cin
        w = jax.random.normal(kw_, (4, 4, cin, cout),
                              jnp.float32) / jnp.sqrt(fan_in)
        w = w.reshape(16 * cin, cout)                       # HWIO flattened
        w = jnp.pad(w, ((0, 0), (0, cpad - cout)))          # lane-dense Cout
        params[f"w{i}"] = w.astype(jnp.bfloat16)
        if s["bias"]:
            b = 0.01 * jax.random.normal(kb_, (1, cout), jnp.float32)
        else:
            b = jnp.zeros((1, cout), jnp.float32)
        params[f"b{i}"] = jnp.pad(b, ((0, 0), (0, cpad - cout)))
        if s["bn"]:
            g = 1.0 + 0.1 * jax.random.normal(kg_, (1, cout), jnp.float32)
            be = 0.1 * jax.random.normal(kbe_, (1, cout), jnp.float32)
            params[f"gamma{i}"] = jnp.pad(g, ((0, 0), (0, cpad - cout)),
                                          constant_values=1.0)
            params[f"beta{i}"] = jnp.pad(be, ((0, 0), (0, cpad - cout)))
    return params


def nlayer_discriminator_forward(x_nchw, params, specs):
    x = jnp.transpose(x_nchw, (0, 2, 3, 1)).astype(jnp.bfloat16)  # NCHW -> NHWC
    for i, s in enumerate(specs):
        cols, N, Ho, Wo = im2col(x, 4, s["stride"], 1)
        M = cols.shape[0]
        tm = _choose_tm(M)
        Mp = _round_up(M, tm)
        if Mp != M:
            cols = jnp.pad(cols, ((0, Mp - M), (0, 0)))     # zero rows: harmless
        cout = s["cout"]
        if s["bn"]:
            y, ssum, ssq = conv_matmul_stats(cols, params[f"w{i}"], tm=tm)
            scale, shift = bn_scale_shift(ssum, ssq, params[f"gamma{i}"],
                                          params[f"beta{i}"], M)
            y = affine_act(y, scale, shift, tm=tm)
        else:
            y = conv_matmul_bias_act(cols, params[f"w{i}"], params[f"b{i}"],
                                     apply_act=s["act"], tm=tm)
        x = y[:M, :cout].reshape(N, Ho, Wo, cout)
    return jnp.transpose(x, (0, 3, 1, 2)).astype(jnp.float32)     # NHWC -> NCHW


# ----------------------------------------------------------------------------
if __name__ == "__main__":
    key = jax.random.PRNGKey(0)
    kx, kp = jax.random.split(key)

    # Small shapes consistent with the module: 3 stride-2 convs + two k=4,s=1
    # convs need spatial >= 32 to keep all feature maps non-empty.
    N, input_nc, H, W = 2, 4, 32, 32
    ndf, n_layers = 8, 3

    x = jax.random.normal(kx, (N, input_nc, H, W), jnp.float32)
    specs = build_layer_specs(input_nc, ndf, n_layers)
    params = init_params(kp, specs)

    out = nlayer_discriminator_forward(x, params, specs)
    out = jax.block_until_ready(out)

    # 32 -> 16 -> 8 -> 4 -> 3 -> 2, single output channel (PatchGAN logits)
    assert out.shape == (N, 1, 2, 2), out.shape
    assert jnp.all(jnp.isfinite(out))
    print("KERNEL_OK")
</pallas_src>

<mosaic_0001>
module attributes {stable_mosaic.version = 11 : i64} {
  func.func @_conv_bias_act_kernel(%arg0: i32, %arg1: memref<256x64xbf16, #tpu.memory_space<vmem>>, %arg2: memref<64x128xbf16, #tpu.memory_space<vmem>>, %arg3: memref<1x128xf32, #tpu.memory_space<vmem>>, %arg4: memref<256x128xbf16, #tpu.memory_space<vmem>>) attributes {dimension_semantics = [#tpu.dimension_semantics<parallel>], iteration_bounds = array<i64: 2>, scalar_prefetch = 0 : i64, scratch_operands = 0 : i64, tpu.core_type = #tpu.core_type<tc>, window_params = [{transform_indices = @transform_0, window_bounds = array<i64: 256, 64>}, {pipeline_mode = #tpu.pipeline_mode<synchronous>, transform_indices = @transform_1, window_bounds = array<i64: 64, 128>}, {pipeline_mode = #tpu.pipeline_mode<synchronous>, transform_indices = @transform_2, window_bounds = array<i64: 1, 128>}, {transform_indices = @transform_3, window_bounds = array<i64: 256, 128>}]} {
    %c0 = arith.constant 0 : index
    %c0_0 = arith.constant 0 : index
    %0 = vector.load %arg1[%c0, %c0_0] : memref<256x64xbf16, #tpu.memory_space<vmem>>, vector<256x64xbf16>
    %c0_1 = arith.constant 0 : index
    %c0_2 = arith.constant 0 : index
    %1 = vector.load %arg2[%c0_1, %c0_2] : memref<64x128xbf16, #tpu.memory_space<vmem>>, vector<64x128xbf16>
    %cst = arith.constant dense<0.000000e+00> : vector<256x128xf32>
    %2 = tpu.matmul %0, %1, %cst {dimension_numbers = #tpu.dot_dimension_numbers<[1], [0], [0], [1], [0, 0, 1, 1], [], []>} : vector<256x64xbf16>, vector<64x128xbf16>, vector<256x128xf32> -> vector<256x128xf32>
    %c0_3 = arith.constant 0 : index
    %c0_4 = arith.constant 0 : index
    %3 = vector.load %arg3[%c0_3, %c0_4] : memref<1x128xf32, #tpu.memory_space<vmem>>, vector<1x128xf32>
    %4 = vector.broadcast %3 : vector<1x128xf32> to vector<256x128xf32>
    %5 = arith.addf %2, %4 : vector<256x128xf32>
    %cst_5 = arith.constant 0.000000e+00 : f32
    %6 = vector.broadcast %cst_5 : f32 to vector<256x128xf32>
    %7 = arith.cmpf oge, %5, %6 : vector<256x128xf32>
    %cst_6 = arith.constant 2.000000e-01 : f32
    %8 = vector.broadcast %cst_6 : f32 to vector<256x128xf32>
    %9 = arith.mulf %8, %5 : vector<256x128xf32>
    %10 = arith.select %7, %5, %9 : vector<256x128xi1>, vector<256x128xf32>
    %11 = arith.truncf %10 : vector<256x128xf32> to vector<256x128xbf16>
    %c0_7 = arith.constant 0 : index
    %c0_8 = arith.constant 0 : index
    %12 = vector.load %arg4[%c0_7, %c0_8] : memref<256x128xbf16, #tpu.memory_space<vmem>>, vector<256x128xbf16>
    tpu.vector_store %arg4[%c0_7, %c0_8], %11 {strides = array<i32>} : memref<256x128xbf16, #tpu.memory_space<vmem>>, vector<256x128xbf16>,
    return
  }
  func.func @transform_0(%arg0: i32) -> (i32, i32) {
    %c0_i32 = arith.constant 0 : i32
    %c0_i32_0 = arith.constant 0 : i32
    return %arg0, %c0_i32 : i32, i32
  }
  func.func @transform_1(%arg0: i32) -> (i32, i32) {
    %c0_i32 = arith.constant 0 : i32
    %c0_i32_0 = arith.constant 0 : i32
    %c0_i32_1 = arith.constant 0 : i32
    return %c0_i32, %c0_i32_0 : i32, i32
  }
  func.func @transform_2(%arg0: i32) -> (i32, i32) {
    %c0_i32 = arith.constant 0 : i32
    %c0_i32_0 = arith.constant 0 : i32
    %c0_i32_1 = arith.constant 0 : i32
    return %c0_i32, %c0_i32_0 : i32, i32
  }
  func.func @transform_3(%arg0: i32) -> (i32, i32) {
    %c0_i32 = arith.constant 0 : i32
    %c0_i32_0 = arith.constant 0 : i32
    return %arg0, %c0_i32 : i32, i32
  }
}

</mosaic_0001>

<llo_original>
// kernel: tpu_custom_call.1
$region0: #{tpu_custom_call.1}
  #allocation0 [shape = 'u32[]', space=smem, size = 0x4, offset = 0x4, fixed_abs, tag = 'smem constant byte address 0x4 - core index']
  #allocation1 [shape = 'u32[144,128]{1,0:T(1,128)}', space=vmem, size = 0x12000, scoped, tag = 'internal scratch']
  %s0 = inlined_call_operand.vmem [shape: bf16[512,64], index: 0, kind: input, shape index: {}]
  %s1 = inlined_call_operand.vmem [shape: bf16[64,128], index: 1, kind: input, shape index: {}]
  %s2 = inlined_call_operand.vmem [shape: f32[1,128], index: 2, kind: input, shape index: {}]
  %s3 = inlined_call_operand.hbm [shape: bf16[512,128], index: 3, kind: output, shape index: {}]
  %s4 = sld [smem:[#allocation0]]
  $region45: #{tpu_custom_call.1} parent=0
    _
  %s6 = ssub.s32 1, %s4
  %s7 = scalar_select 0, %s6, %s4
  $region1: #{tpu_custom_call.1} parent=0
    #allocation2 [shape = 'u8[131072]{0}', space=vmem, size = 0x20000, scoped, tag = 'output window, operand 0']
    #allocation3 [shape = 's32[2]{0}', space=sflag, size = 0x8, scoped, tag = 'scoped memory for tpu_custom_call.1']
    %8 = vsyncpa [#allocation3], 0
    %s9 = scalar_lea.sflag [#allocation3], 1
    %10 = vsyncpa %s9, 0
    loop: start=0, step=1, limit=4
    $region2: #{tpu_custom_call.1} parent=1 // loop_pre_header
      _
    $region3: #{tpu_custom_call.1} parent=1 // loop_header
      %s12 = sphi 0, %s16
      %p13 = scmp.ge.s32.totalorder %s12, 4
      %s22 = sphi 0, %s24
      %s25 = sphi 0, %s22
      %s26 = sphi 0, %s25
      %s42 = sphi 0, %s26
      %s46 = sphi 0, %s46
      %s48 = sphi 0, %s46
      %s49 = sphi 0, %s48
      %s63 = sphi 0, %s49
      %s67 = sphi 0, %s67
      %s69 = sphi 0, %s67
      %s70 = sphi 0, %s69
      %s84 = sphi 0, %s70
      %s90 = sphi 0, %s92
      %s93 = sphi 0, %s90
      %s94 = sphi 0, %s93
      %s110 = sphi 0, %s94
    $region4: #{tpu_custom_call.1} parent=1 // loop_header_branch
      %15 = sbr.rel (%p13) target = $region8
    $region5: #{tpu_custom_call.1} parent=1 // loop_body
      %s17 = ssub.s32 %s12, 1
      %s18 = ssub.s32 %s12, 2
      %s19 = sadd.s32 %s12, 1
      %s20 = ssub.s32 %s12, %s19
      %p21 = scmp.eq.s32.totalorder %s20, 0
      %s23 = sadd.s32 %s22, 1
      %s24 = scalar_select %p21, %s22, %s23
      %p27 = pneg %p21
      %p28 = scmp.eq.s32.totalorder %s12, 1
      %p29 = por %p27, %p28
      %p30 = scmp.ne.s32.totalorder %s22, %s25
      %p31 = scmp.eq.s32.totalorder %s12, 0
      %p32 = por %p30, %p31
      %p33 = scmp.ne.s32.totalorder %s22, %s25
      %p34 = scmp.eq.s32.totalorder %s17, 1
      %p35 = por %p33, %p34
      %p36 = scmp.ne.s32.totalorder %s25, %s26
      %p37 = scmp.eq.s32.totalorder %s17, 0
      %p38 = por %p36, %p37
      %p39 = scmp.ne.s32.totalorder %s25, %s26
      %p40 = scmp.eq.s32.totalorder %s18, 1
      %p41 = por %p39, %p40
      %p43 = scmp.ne.s32.totalorder %s26, %s42
      %p44 = scmp.eq.s32.totalorder %s18, 0
      %p45 = por %p43, %p44
      %s47 = sadd.s32 %s46, 1
      %p50 = scmp.eq.s32.totalorder %s12, 1
      %p51 = scmp.ne.s32.totalorder %s46, %s48
      %p52 = scmp.eq.s32.totalorder %s12, 0
      %p53 = por %p51, %p52
      %p54 = scmp.ne.s32.totalorder %s46, %s48
      %p55 = scmp.eq.s32.totalorder %s17, 1
      %p56 = por %p54, %p55
      %p57 = scmp.ne.s32.totalorder %s48, %s49
      %p58 = scmp.eq.s32.totalorder %s17, 0
      %p59 = por %p57, %p58
      %p60 = scmp.ne.s32.totalorder %s48, %s49
      %p61 = scmp.eq.s32.totalorder %s18, 1
      %p62 = por %p60, %p61
      %p64 = scmp.ne.s32.totalorder %s49, %s63
      %p65 = scmp.eq.s32.totalorder %s18, 0
      %p66 = por %p64, %p65
      %s68 = sadd.s32 %s67, 1
      %p71 = scmp.eq.s32.totalorder %s12, 1
      %p72 = scmp.ne.s32.totalorder %s67, %s69
      %p73 = scmp.eq.s32.totalorder %s12, 0
      %p74 = por %p72, %p73
      %p75 = scmp.ne.s32.totalorder %s67, %s69
      %p76 = scmp.eq.s32.totalorder %s17, 1
      %p77 = por %p75, %p76
      %p78 = scmp.ne.s32.totalorder %s69, %s70
      %p79 = scmp.eq.s32.totalorder %s17, 0
      %p80 = por %p78, %p79
      %p81 = scmp.ne.s32.totalorder %s69, %s70
      %p82 = scmp.eq.s32.totalorder %s18, 1
      %p83 = por %p81, %p82
      %p85 = scmp.ne.s32.totalorder %s70, %s84
      %p86 = scmp.eq.s32.totalorder %s18, 0
      %p87 = por %p85, %p86
      %s88 = ssub.s32 %s12, %s19
      %p89 = scmp.eq.s32.totalorder %s88, 0
      %s91 = sadd.s32 %s90, 1
      %s92 = scalar_select %p89, %s90, %s91
      %p95 = pneg %p89
      %p96 = scmp.eq.s32.totalorder %s12, 1
      %p97 = por %p95, %p96
      %p98 = scmp.ne.s32.totalorder %s90, %s93
      %p99 = scmp.eq.s32.totalorder %s12, 0
      %p100 = por %p98, %p99
      %p101 = scmp.ne.s32.totalorder %s90, %s93
      %p102 = scmp.eq.s32.totalorder %s17, 1
      %p103 = por %p101, %p102
      %p104 = scmp.ne.s32.totalorder %s93, %s94
      %p105 = scmp.eq.s32.totalorder %s17, 0
      %p106 = por %p104, %p105
      %p107 = scmp.ne.s32.totalorder %s93, %s94
      %p108 = scmp.eq.s32.totalorder %s18, 1
      %p109 = por %p107, %p108
      %p111 = scmp.ne.s32.totalorder %s94, %s110
      %p112 = scmp.eq.s32.totalorder %s18, 0
      %p113 = por %p111, %p112
      %p114 = scmp.le.s32.totalorder 1, %s12
      %p115 = scmp.lt.s32.totalorder %s12, 3
      %p116 = pnand %p114, %p115
      %p117 = pneg %p116
      // Predicated region
      $region9: #{tpu_custom_call.1} parent=5 // pred_check
        _
      $region10: #{tpu_custom_call.1} parent=5 // pred_check_branch
        %119 = sbr.rel (%p116) target = $region12
      $region11: #{tpu_custom_call.1} parent=5 // pred_region
        %s120 = ssub.s32 %s12, 1
        // Predicated region
        $region13: #{tpu_custom_call.1} parent=11 // pred_check
          %p121 = pneg %p59
        $region14: #{tpu_custom_call.1} parent=11 // pred_check_branch
          %123 = sbr.rel (%p121) target = $region16
        $region15: #{tpu_custom_call.1} parent=11 // pred_region
          _
        $region16: #{tpu_custom_call.1} parent=11 // pred_fallthru
          _
        // Predicated region
        $region17: #{tpu_custom_call.1} parent=11 // pred_check
          %p124 = pneg %p80
        $region18: #{tpu_custom_call.1} parent=11 // pred_check_branch
          %126 = sbr.rel (%p124) target = $region20
        $region19: #{tpu_custom_call.1} parent=11 // pred_region
          _
        $region20: #{tpu_custom_call.1} parent=11 // pred_fallthru
          _
      $region12: #{tpu_custom_call.1} parent=5 // pred_fallthru
        _
      %p127 = scmp.lt.s32.totalorder %s12, 2
      // Predicated region
      $region21: #{tpu_custom_call.1} parent=5 // pred_check
        %p128 = pneg %p127
      $region22: #{tpu_custom_call.1} parent=5 // pred_check_branch
        %130 = sbr.rel (%p128) target = $region24
      $region23: #{tpu_custom_call.1} parent=5 // pred_region
        // Predicated region
        $region25: #{tpu_custom_call.1} parent=23 // pred_check
          %p131 = pneg %p32
        $region26: #{tpu_custom_call.1} parent=23 // pred_check_branch
          %133 = sbr.rel (%p131) target = $region28
        $region27: #{tpu_custom_call.1} parent=23 // pred_region
          %s134 = smul.u32 32, %s12
          %p135 = scmp.lt.s32.totalorder %s134, 63
          %s136 = scalar_select %p135, %s134, 63
          %s137 = smul.addr %s136, 4
          %s138 = scalar_lea.vmem %s0, %s137
          %s139 = smul.u32 32, %s12
        $region28: #{tpu_custom_call.1} parent=23 // pred_fallthru
          _
      $region24: #{tpu_custom_call.1} parent=5 // pred_fallthru
        _
      %p140 = scmp.le.s32.totalorder 1, %s12
      %p141 = scmp.lt.s32.totalorder %s12, 3
      %p142 = pnand %p140, %p141
      %p143 = pneg %p142
      // Predicated region
      $region29: #{tpu_custom_call.1} parent=5 // pred_check
        _
      $region30: #{tpu_custom_call.1} parent=5 // pred_check_branch
        %145 = sbr.rel (%p142) target = $region32
      $region31: #{tpu_custom_call.1} parent=5 // pred_region
        %s146 = ssub.s32 %s12, 1
        %s147 = smul.u32 32, %s17
        %p148 = scmp.lt.s32.totalorder %s147, 63
        %s149 = scalar_select %p148, %s147, 63
        %s150 = smul.addr %s149, 4
        %s151 = scalar_lea.vmem %s0, %s150
        %p152 = pneg %p38
        %p153 = pneg %p35
        %p154 = pneg %p59
        %p155 = pneg %p56
        %p156 = pneg %p80
        %p157 = pneg %p77
        %p158 = pneg %p106
        %p159 = pneg %p103
        %s160 = sand.u32 %s93, 1
        %s161 = scalar_lea.sflag [#allocation3], %s160
        %s162 = sand.u32 %s93, 1
        %s163 = smul.addr %s162, 128
        %s164 = scalar_lea.vmem [#allocation2], %s163
        %s165 = smul.u32 32, %s17
        %p166 = scmp.lt.s32.totalorder %s165, 63
        %s167 = scalar_select %p166, %s165, 63
        %s168 = smul.addr %s167, 4
        %s169 = scalar_lea.vmem %s0, %s168
        %s170 = smul.u32 32, %s17
        %s171 = smul.u32 32, %s17
        %v173 = vld [vmem:[%s169] sm:$0xf]
        %v174 = vld [vmem:[%s169 + $0x4] sm:$0xf]
        %v175 = vld [vmem:[%s169 + $0x8] sm:$0xf]
        %v176 = vld [vmem:[%s169 + $0xc] sm:$0xf]
        %v177 = vld [vmem:[%s169 + $0x10] sm:$0xf]
        %v178 = vld [vmem:[%s169 + $0x14] sm:$0xf]
        %v179 = vld [vmem:[%s169 + $0x18] sm:$0xf]
        %v180 = vld [vmem:[%s169 + $0x1c] sm:$0xf]
        %v181 = vld [vmem:[%s169 + $0x20] sm:$0xf]
        %v182 = vld [vmem:[%s169 + $0x24] sm:$0xf]
        %v183 = vld [vmem:[%s169 + $0x28] sm:$0xf]
        %v184 = vld [vmem:[%s169 + $0x2c] sm:$0xf]
        %v185 = vld [vmem:[%s169 + $0x30] sm:$0xf]
        %v186 = vld [vmem:[%s169 + $0x34] sm:$0xf]
        %v187 = vld [vmem:[%s169 + $0x38] sm:$0xf]
        %v188 = vld [vmem:[%s169 + $0x3c] sm:$0xf]
        %v189 = vld [vmem:[%s169 + $0x40] sm:$0xf]
        %v190 = vld [vmem:[%s169 + $0x44] sm:$0xf]
        %v191 = vld [vmem:[%s169 + $0x48] sm:$0xf]
        %v192 = vld [vmem:[%s169 + $0x4c] sm:$0xf]
        %v193 = vld [vmem:[%s169 + $0x50] sm:$0xf]
        %v194 = vld [vmem:[%s169 + $0x54] sm:$0xf]
        %v195 = vld [vmem:[%s169 + $0x58] sm:$0xf]
        %v196 = vld [vmem:[%s169 + $0x5c] sm:$0xf]
        %v197 = vld [vmem:[%s169 + $0x60] sm:$0xf]
        %v198 = vld [vmem:[%s169 + $0x64] sm:$0xf]
        %v199 = vld [vmem:[%s169 + $0x68] sm:$0xf]
        %v200 = vld [vmem:[%s169 + $0x6c] sm:$0xf]
        %v201 = vld [vmem:[%s169 + $0x70] sm:$0xf]
        %v202 = vld [vmem:[%s169 + $0x74] sm:$0xf]
        %v203 = vld [vmem:[%s169 + $0x78] sm:$0xf]
        %v204 = vld [vmem:[%s169 + $0x7c] sm:$0xf]
        %v205 = vld [vmem:[%s1] sm:$0xf]
        %v206 = vld [vmem:[%s1 + $0x4] sm:$0xf]
        %v207 = vld [vmem:[%s1 + $0x8] sm:$0xf]
        %v208 = vld [vmem:[%s1 + $0xc] sm:$0xf]
        %v209 = vld [vmem:[%s1 + $0x10] sm:$0xf]
        %v210 = vld [vmem:[%s1 + $0x14] sm:$0xf]
        %v211 = vld [vmem:[%s1 + $0x18] sm:$0xf]
        %v212 = vld [vmem:[%s1 + $0x1c] sm:$0xf]
        %v213 = vld [vmem:[%s2] sm:$0x1]
        %v215 = vlaneseq
        %v216 = vshrl.u32 %v215, 7
        %v217 = vsub.s32 0, %v216
        %v218 = vrot.slane %v213, %v217
        %v252 = vunpack.c.l.b16 %v173
        %v253 = vunpack.c.l.b16 %v174
        %v254 = vunpack.c.l.b16 %v175
        %v255 = vunpack.c.l.b16 %v176
        %v256 = vunpack.c.l.b16 %v177
        %v257 = vunpack.c.l.b16 %v178
        %v258 = vunpack.c.l.b16 %v179
        %v259 = vunpack.c.l.b16 %v180
        %v260 = vunpack.c.l.b16 %v181
        %v261 = vunpack.c.l.b16 %v182
        %v262 = vunpack.c.l.b16 %v183
        %v263 = vunpack.c.l.b16 %v184
        %v264 = vunpack.c.l.b16 %v185
        %v265 = vunpack.c.l.b16 %v186
        %v266 = vunpack.c.l.b16 %v187
        %v267 = vunpack.c.l.b16 %v188
        %v268 = vunpack.c.l.b16 %v189
        %v269 = vunpack.c.l.b16 %v190
        %v270 = vunpack.c.l.b16 %v191
        %v271 = vunpack.c.l.b16 %v192
        %v272 = vunpack.c.l.b16 %v193
        %v273 = vunpack.c.l.b16 %v194
        %v274 = vunpack.c.l.b16 %v195
        %v275 = vunpack.c.l.b16 %v196
        %v276 = vunpack.c.l.b16 %v197
        %v277 = vunpack.c.l.b16 %v198
        %v278 = vunpack.c.l.b16 %v199
        %v279 = vunpack.c.l.b16 %v200
        %v280 = vunpack.c.l.b16 %v201
        %v281 = vunpack.c.l.b16 %v202
        %v282 = vunpack.c.l.b16 %v203
        %v283 = vunpack.c.l.b16 %v204
        %v284 = vpack.c.b16 %v253, %v252
        %v285 = vpack.c.b16 %v255, %v254
        %v286 = vpack.c.b16 %v257, %v256
        %v287 = vpack.c.b16 %v259, %v258
        %v288 = vpack.c.b16 %v261, %v260
        %v289 = vpack.c.b16 %v263, %v262
        %v290 = vpack.c.b16 %v265, %v264
        %v291 = vpack.c.b16 %v267, %v266
        %v292 = vpack.c.b16 %v269, %v268
        %v293 = vpack.c.b16 %v271, %v270
        %v294 = vpack.c.b16 %v273, %v272
        %v295 = vpack.c.b16 %v275, %v274
        %v296 = vpack.c.b16 %v277, %v276
        %v297 = vpack.c.b16 %v279, %v278
        %v298 = vpack.c.b16 %v281, %v280
        %v299 = vpack.c.b16 %v283, %v282
        %v308 = vunpack.c.l.b16 %v205
        %v309 = vunpack.c.l.b16 %v206
        %v310 = vunpack.c.l.b16 %v207
        %v311 = vunpack.c.l.b16 %v208
        %v312 = vunpack.c.l.b16 %v209
        %v313 = vunpack.c.l.b16 %v210
        %v314 = vunpack.c.l.b16 %v211
        %v315 = vunpack.c.l.b16 %v212
        %v316 = vpack.c.b16 %v309, %v308
        %v317 = vpack.c.b16 %v311, %v310
        %v318 = vpack.c.b16 %v313, %v312
        %v319 = vpack.c.b16 %v315, %v314
        %vm324 = vcmask 523264
        %v326 = vsel %vm324, %v284, 0
        %v329 = vsel %vm324, %v285, 0
        %v332 = vsel %vm324, %v286, 0
        %v335 = vsel %vm324, %v287, 0
        %v338 = vsel %vm324, %v288, 0
        %v341 = vsel %vm324, %v289, 0
        %v344 = vsel %vm324, %v290, 0
        %v347 = vsel %vm324, %v291, 0
        %v350 = vsel %vm324, %v292, 0
        %v353 = vsel %vm324, %v293, 0
        %v356 = vsel %vm324, %v294, 0
        %v359 = vsel %vm324, %v295, 0
        %v362 = vsel %vm324, %v296, 0
        %v365 = vsel %vm324, %v297, 0
        %v368 = vsel %vm324, %v298, 0
        %v371 = vsel %vm324, %v299, 0
        %373 = vmatprep.subr.bf16.mxu0 0
        %374 = vmatpush1.bf16.msra.mxu0 0
        %375 = vmatprep.subr.bf16.mxu0 0
        %376 = vmatpush1.bf16.msra.mxu0 0
        %377 = vmatprep.subr.bf16.mxu0 0
        %378 = vmatpush1.bf16.msra.mxu0 0
        %379 = vmatprep.subr.bf16.mxu0 0
        %380 = vmatpush1.bf16.msra.mxu0 0
        %381 = vmatprep.subr.bf16.mxu0 0
        %382 = vmatpush1.bf16.msra.mxu0 %v319
        %383 = vmatprep.subr.bf16.mxu0 0
        %384 = vmatpush1.bf16.msra.mxu0 %v318
        %385 = vmatprep.subr.bf16.mxu0 0
        %386 = vmatpush1.bf16.msra.mxu0 %v317
        %387 = vmatprep.subr.bf16.mxu0 0
        %388 = vmatpush1.bf16.msra.mxu0 %v316
        %389 = vmatprep.subr.bf16.mxu0 0
        %390 = vmatpush2.bf16.msra.mxu0 0
        %391 = vmatprep.subr.bf16.mxu0 0
        %392 = vmatpush2.bf16.msra.mxu0 0
        %393 = vmatprep.subr.bf16.mxu0 0
        %394 = vmatpush2.bf16.msra.mxu0 0
        %395 = vmatprep.subr.bf16.mxu0 0
        %396 = vmatpush2.bf16.msra.mxu0 0
        %397 = vmatprep.subr.bf16.mxu0 0
        %398 = vmatpush2.bf16.msra.mxu0 0
        %399 = vmatprep.subr.bf16.mxu0 0
        %400 = vmatpush2.bf16.msra.mxu0 0
        %401 = vmatprep.subr.bf16.mxu0 0
        %402 = vmatpush2.bf16.msra.mxu0 0
        %403 = vmatprep.subr.bf16.mxu0 0
        %404 = vmatpush2.bf16.msra.mxu0 0
        %405 = vmatprep.mubr.bf16.mxu0 0
        %406 = vmatmul.mubr.bf16.gmra.mxu0 %v326
        %v407 = vpop.f32.mrf.mxu0
        %v408 = vadd.f32 %v218, %v407
        %v409 = vpop.f32.mrf.mxu0
        %v410 = vpop.f32.mrf.mxu0
        %v411 = vadd.f32 %v218, %v410
        %v412 = vpop.f32.mrf.mxu0
        %413 = vmatprep.mubr.bf16.mxu0 0
        %414 = vmatmul.mubr.bf16.gmra.mxu0 %v329
        %v415 = vpop.f32.mrf.mxu0
        %v416 = vadd.f32 %v218, %v415
        %v417 = vpop.f32.mrf.mxu0
        %v418 = vpop.f32.mrf.mxu0
        %v419 = vadd.f32 %v218, %v418
        %v420 = vpop.f32.mrf.mxu0
        %421 = vmatprep.mubr.bf16.mxu0 0
        %422 = vmatmul.mubr.bf16.gmra.mxu0 %v332
        %v423 = vpop.f32.mrf.mxu0
        %v424 = vadd.f32 %v218, %v423
        %v425 = vpop.f32.mrf.mxu0
        %v426 = vpop.f32.mrf.mxu0
        %v427 = vadd.f32 %v218, %v426
        %v428 = vpop.f32.mrf.mxu0
        %429 = vmatprep.mubr.bf16.mxu0 0
        %430 = vmatmul.mubr.bf16.gmra.mxu0 %v335
        %v431 = vpop.f32.mrf.mxu0
        %v432 = vadd.f32 %v218, %v431
        %v433 = vpop.f32.mrf.mxu0
        %v434 = vpop.f32.mrf.mxu0
        %v435 = vadd.f32 %v218, %v434
        %v436 = vpop.f32.mrf.mxu0
        %437 = vmatprep.mubr.bf16.mxu0 0
        %438 = vmatmul.mubr.bf16.gmra.mxu0 %v338
        %v439 = vpop.f32.mrf.mxu0
        %v440 = vadd.f32 %v218, %v439
        %v441 = vpop.f32.mrf.mxu0
        %v442 = vpop.f32.mrf.mxu0
        %v443 = vadd.f32 %v218, %v442
        %v444 = vpop.f32.mrf.mxu0
        %445 = vmatprep.mubr.bf16.mxu0 0
        %446 = vmatmul.mubr.bf16.gmra.mxu0 %v341
        %v447 = vpop.f32.mrf.mxu0
        %v448 = vadd.f32 %v218, %v447
        %v449 = vpop.f32.mrf.mxu0
        %v450 = vpop.f32.mrf.mxu0
        %v451 = vadd.f32 %v218, %v450
        %v452 = vpop.f32.mrf.mxu0
        %453 = vmatprep.mubr.bf16.mxu0 0
        %454 = vmatmul.mubr.bf16.gmra.mxu0 %v344
        %v455 = vpop.f32.mrf.mxu0
        %v456 = vadd.f32 %v218, %v455
        %v457 = vpop.f32.mrf.mxu0
        %v458 = vpop.f32.mrf.mxu0
        %v459 = vadd.f32 %v218, %v458
        %v460 = vpop.f32.mrf.mxu0
        %461 = vmatprep.mubr.bf16.mxu0 0
        %462 = vmatmul.mubr.bf16.gmra.mxu0 %v347
        %v463 = vpop.f32.mrf.mxu0
        %v464 = vadd.f32 %v218, %v463
        %v465 = vpop.f32.mrf.mxu0
        %v466 = vpop.f32.mrf.mxu0
        %v467 = vadd.f32 %v218, %v466
        %v468 = vpop.f32.mrf.mxu0
        %469 = vmatprep.mubr.bf16.mxu0 0
        %470 = vmatmul.mubr.bf16.gmra.mxu0 %v350
        %v471 = vpop.f32.mrf.mxu0
        %v472 = vadd.f32 %v218, %v471
        %v473 = vpop.f32.mrf.mxu0
        %v474 = vpop.f32.mrf.mxu0
        %v475 = vadd.f32 %v218, %v474
        %v476 = vpop.f32.mrf.mxu0
        %477 = vmatprep.mubr.bf16.mxu0 0
        %478 = vmatmul.mubr.bf16.gmra.mxu0 %v353
        %v479 = vpop.f32.mrf.mxu0
        %v480 = vadd.f32 %v218, %v479
        %v481 = vpop.f32.mrf.mxu0
        %v482 = vpop.f32.mrf.mxu0
        %v483 = vadd.f32 %v218, %v482
        %v484 = vpop.f32.mrf.mxu0
        %485 = vmatprep.mubr.bf16.mxu0 0
        %486 = vmatmul.mubr.bf16.gmra.mxu0 %v356
        %v487 = vpop.f32.mrf.mxu0
        %v488 = vadd.f32 %v218, %v487
        %v489 = vpop.f32.mrf.mxu0
        %v490 = vpop.f32.mrf.mxu0
        %v491 = vadd.f32 %v218, %v490
        %v492 = vpop.f32.mrf.mxu0
        %493 = vmatprep.mubr.bf16.mxu0 0
        %494 = vmatmul.mubr.bf16.gmra.mxu0 %v359
        %v495 = vpop.f32.mrf.mxu0
        %v496 = vadd.f32 %v218, %v495
        %v497 = vpop.f32.mrf.mxu0
        %v498 = vpop.f32.mrf.mxu0
        %v499 = vadd.f32 %v218, %v498
        %v500 = vpop.f32.mrf.mxu0
        %501 = vmatprep.mubr.bf16.mxu0 0
        %502 = vmatmul.mubr.bf16.gmra.mxu0 %v362
        %v503 = vpop.f32.mrf.mxu0
        %v504 = vadd.f32 %v218, %v503
        %v505 = vpop.f32.mrf.mxu0
        %v506 = vpop.f32.mrf.mxu0
        %v507 = vadd.f32 %v218, %v506
        %v508 = vpop.f32.mrf.mxu0
        %509 = vmatprep.mubr.bf16.mxu0 0
        %510 = vmatmul.mubr.bf16.gmra.mxu0 %v365
        %v511 = vpop.f32.mrf.mxu0
        %v512 = vadd.f32 %v218, %v511
        %v513 = vpop.f32.mrf.mxu0
        %v514 = vpop.f32.mrf.mxu0
        %v515 = vadd.f32 %v218, %v514
        %v516 = vpop.f32.mrf.mxu0
        %517 = vmatprep.mubr.bf16.mxu0 0
        %518 = vmatmul.mubr.bf16.gmra.mxu0 %v368
        %v519 = vpop.f32.mrf.mxu0
        %v520 = vadd.f32 %v218, %v519
        %v521 = vpop.f32.mrf.mxu0
        %v522 = vpop.f32.mrf.mxu0
        %v523 = vadd.f32 %v218, %v522
        %v524 = vpop.f32.mrf.mxu0
        %525 = vmatprep.mubr.bf16.mxu0 0
        %526 = vmatmul.mubr.bf16.gmra.mxu0 %v371
        %v527 = vpop.f32.mrf.mxu0
        %v528 = vadd.f32 %v218, %v527
        %v529 = vpop.f32.mrf.mxu0
        %v530 = vpop.f32.mrf.mxu0
        %v531 = vadd.f32 %v218, %v530
        %v532 = vpop.f32.mrf.mxu0
        %533 = vdwg.mxu0
        %vm534 = vcmp.ge.f32.partialorder %v408, 0.0
        %vm535 = vcmp.ge.f32.partialorder %v411, 0.0
        %vm536 = vcmp.ge.f32.partialorder %v416, 0.0
        %vm537 = vcmp.ge.f32.partialorder %v419, 0.0
        %vm538 = vcmp.ge.f32.partialorder %v424, 0.0
        %vm539 = vcmp.ge.f32.partialorder %v427, 0.0
        %vm540 = vcmp.ge.f32.partialorder %v432, 0.0
        %vm541 = vcmp.ge.f32.partialorder %v435, 0.0
        %vm542 = vcmp.ge.f32.partialorder %v440, 0.0
        %vm543 = vcmp.ge.f32.partialorder %v443, 0.0
        %vm544 = vcmp.ge.f32.partialorder %v448, 0.0
        %vm545 = vcmp.ge.f32.partialorder %v451, 0.0
        %vm546 = vcmp.ge.f32.partialorder %v456, 0.0
        %vm547 = vcmp.ge.f32.partialorder %v459, 0.0
        %vm548 = vcmp.ge.f32.partialorder %v464, 0.0
        %vm549 = vcmp.ge.f32.partialorder %v467, 0.0
        %vm550 = vcmp.ge.f32.partialorder %v472, 0.0
        %vm551 = vcmp.ge.f32.partialorder %v475, 0.0
        %vm552 = vcmp.ge.f32.partialorder %v480, 0.0
        %vm553 = vcmp.ge.f32.partialorder %v483, 0.0
        %vm554 = vcmp.ge.f32.partialorder %v488, 0.0
        %vm555 = vcmp.ge.f32.partialorder %v491, 0.0
        %vm556 = vcmp.ge.f32.partialorder %v496, 0.0
        %vm557 = vcmp.ge.f32.partialorder %v499, 0.0
        %vm558 = vcmp.ge.f32.partialorder %v504, 0.0
        %vm559 = vcmp.ge.f32.partialorder %v507, 0.0
        %vm560 = vcmp.ge.f32.partialorder %v512, 0.0
        %vm561 = vcmp.ge.f32.partialorder %v515, 0.0
        %vm562 = vcmp.ge.f32.partialorder %v520, 0.0
        %vm563 = vcmp.ge.f32.partialorder %v523, 0.0
        %vm564 = vcmp.ge.f32.partialorder %v528, 0.0
        %vm565 = vcmp.ge.f32.partialorder %v531, 0.0
        %v566 = vmul.f32 %v408, 0.2
        %v567 = vmul.f32 %v411, 0.2
        %v568 = vmul.f32 %v416, 0.2
        %v569 = vmul.f32 %v419, 0.2
        %v570 = vmul.f32 %v424, 0.2
        %v571 = vmul.f32 %v427, 0.2
        %v572 = vmul.f32 %v432, 0.2
        %v573 = vmul.f32 %v435, 0.2
        %v574 = vmul.f32 %v440, 0.2
        %v575 = vmul.f32 %v443, 0.2
        %v576 = vmul.f32 %v448, 0.2
        %v577 = vmul.f32 %v451, 0.2
        %v578 = vmul.f32 %v456, 0.2
        %v579 = vmul.f32 %v459, 0.2
        %v580 = vmul.f32 %v464, 0.2
        %v581 = vmul.f32 %v467, 0.2
        %v582 = vmul.f32 %v472, 0.2
        %v583 = vmul.f32 %v475, 0.2
        %v584 = vmul.f32 %v480, 0.2
        %v585 = vmul.f32 %v483, 0.2
        %v586 = vmul.f32 %v488, 0.2
        %v587 = vmul.f32 %v491, 0.2
        %v588 = vmul.f32 %v496, 0.2
        %v589 = vmul.f32 %v499, 0.2
        %v590 = vmul.f32 %v504, 0.2
        %v591 = vmul.f32 %v507, 0.2
        %v592 = vmul.f32 %v512, 0.2
        %v593 = vmul.f32 %v515, 0.2
        %v594 = vmul.f32 %v520, 0.2
        %v595 = vmul.f32 %v523, 0.2
        %v596 = vmul.f32 %v528, 0.2
        %v597 = vmul.f32 %v531, 0.2
        %v598 = vsel %vm534, %v408, %v566
        %v599 = vsel %vm535, %v411, %v567
        %v600 = vsel %vm536, %v416, %v568
        %v601 = vsel %vm537, %v419, %v569
        %v602 = vsel %vm538, %v424, %v570
        %v603 = vsel %vm539, %v427, %v571
        %v604 = vsel %vm540, %v432, %v572
        %v605 = vsel %vm541, %v435, %v573
        %v606 = vsel %vm542, %v440, %v574
        %v607 = vsel %vm543, %v443, %v575
        %v608 = vsel %vm544, %v448, %v576
        %v609 = vsel %vm545, %v451, %v577
        %v610 = vsel %vm546, %v456, %v578
        %v611 = vsel %vm547, %v459, %v579
        %v612 = vsel %vm548, %v464, %v580
        %v613 = vsel %vm549, %v467, %v581
        %v614 = vsel %vm550, %v472, %v582
        %v615 = vsel %vm551, %v475, %v583
        %v616 = vsel %vm552, %v480, %v584
        %v617 = vsel %vm553, %v483, %v585
        %v618 = vsel %vm554, %v488, %v586
        %v619 = vsel %vm555, %v491, %v587
        %v620 = vsel %vm556, %v496, %v588
        %v621 = vsel %vm557, %v499, %v589
        %v622 = vsel %vm558, %v504, %v590
        %v623 = vsel %vm559, %v507, %v591
        %v624 = vsel %vm560, %v512, %v592
        %v625 = vsel %vm561, %v515, %v593
        %v626 = vsel %vm562, %v520, %v594
        %v627 = vsel %vm563, %v523, %v595
        %v628 = vsel %vm564, %v528, %v596
        %v629 = vsel %vm565, %v531, %v597
        %v630 = vpack.c.bf16 %v599, %v598
        %v631 = vpack.c.bf16 %v601, %v600
        %v632 = vpack.c.bf16 %v603, %v602
        %v633 = vpack.c.bf16 %v605, %v604
        %v634 = vpack.c.bf16 %v607, %v606
        %v635 = vpack.c.bf16 %v609, %v608
        %v636 = vpack.c.bf16 %v611, %v610
        %v637 = vpack.c.bf16 %v613, %v612
        %v638 = vpack.c.bf16 %v615, %v614
        %v639 = vpack.c.bf16 %v617, %v616
        %v640 = vpack.c.bf16 %v619, %v618
        %v641 = vpack.c.bf16 %v621, %v620
        %v642 = vpack.c.bf16 %v623, %v622
        %v643 = vpack.c.bf16 %v625, %v624
        %v644 = vpack.c.bf16 %v627, %v626
        %v645 = vpack.c.bf16 %v629, %v628
        %v662 = vunpack.c.l.b16 %v630
        %v663 = vunpack.c.h.b16 %v630
        %v664 = vunpack.c.l.b16 %v631
        %v665 = vunpack.c.h.b16 %v631
        %v666 = vunpack.c.l.b16 %v632
        %v667 = vunpack.c.h.b16 %v632
        %v668 = vunpack.c.l.b16 %v633
        %v669 = vunpack.c.h.b16 %v633
        %v670 = vunpack.c.l.b16 %v634
        %v671 = vunpack.c.h.b16 %v634
        %v672 = vunpack.c.l.b16 %v635
        %v673 = vunpack.c.h.b16 %v635
        %v674 = vunpack.c.l.b16 %v636
        %v675 = vunpack.c.h.b16 %v636
        %v676 = vunpack.c.l.b16 %v637
        %v677 = vunpack.c.h.b16 %v637
        %v678 = vunpack.c.l.b16 %v638
        %v679 = vunpack.c.h.b16 %v638
        %v680 = vunpack.c.l.b16 %v639
        %v681 = vunpack.c.h.b16 %v639
        %v682 = vunpack.c.l.b16 %v640
        %v683 = vunpack.c.h.b16 %v640
        %v684 = vunpack.c.l.b16 %v641
        %v685 = vunpack.c.h.b16 %v641
        %v686 = vunpack.c.l.b16 %v642
        %v687 = vunpack.c.h.b16 %v642
        %v688 = vunpack.c.l.b16 %v643
        %v689 = vunpack.c.h.b16 %v643
        %v690 = vunpack.c.l.b16 %v644
        %v691 = vunpack.c.h.b16 %v644
        %v692 = vunpack.c.l.b16 %v645
        %v693 = vunpack.c.h.b16 %v645
        %v694 = vpack.c.b16 %v662, %v662
        %v695 = vpack.c.b16 %v663, %v663
        %v696 = vpack.c.b16 %v664, %v664
        %v697 = vpack.c.b16 %v665, %v665
        %v698 = vpack.c.b16 %v666, %v666
        %v699 = vpack.c.b16 %v667, %v667
        %v700 = vpack.c.b16 %v668, %v668
        %v701 = vpack.c.b16 %v669, %v669
        %v702 = vpack.c.b16 %v670, %v670
        %v703 = vpack.c.b16 %v671, %v671
        %v704 = vpack.c.b16 %v672, %v672
        %v705 = vpack.c.b16 %v673, %v673
        %v706 = vpack.c.b16 %v674, %v674
        %v707 = vpack.c.b16 %v675, %v675
        %v708 = vpack.c.b16 %v676, %v676
        %v709 = vpack.c.b16 %v677, %v677
        %v710 = vpack.c.b16 %v678, %v678
        %v711 = vpack.c.b16 %v679, %v679
        %v712 = vpack.c.b16 %v680, %v680
        %v713 = vpack.c.b16 %v681, %v681
        %v714 = vpack.c.b16 %v682, %v682
        %v715 = vpack.c.b16 %v683, %v683
        %v716 = vpack.c.b16 %v684, %v684
        %v717 = vpack.c.b16 %v685, %v685
        %v718 = vpack.c.b16 %v686, %v686
        %v719 = vpack.c.b16 %v687, %v687
        %v720 = vpack.c.b16 %v688, %v688
        %v721 = vpack.c.b16 %v689, %v689
        %v722 = vpack.c.b16 %v690, %v690
        %v723 = vpack.c.b16 %v691, %v691
        %v724 = vpack.c.b16 %v692, %v692
        %v725 = vpack.c.b16 %v693, %v693
        %758 = vst [vmem:[%s164] sm:$0xf] %v694
        %759 = vst [vmem:[%s164 + $0x4] sm:$0xf] %v695
        %760 = vst [vmem:[%s164 + $0x8] sm:$0xf] %v696
        %761 = vst [vmem:[%s164 + $0xc] sm:$0xf] %v697
        %762 = vst [vmem:[%s164 + $0x10] sm:$0xf] %v698
        %763 = vst [vmem:[%s164 + $0x14] sm:$0xf] %v699
        %764 = vst [vmem:[%s164 + $0x18] sm:$0xf] %v700
        %765 = vst [vmem:[%s164 + $0x1c] sm:$0xf] %v701
        %766 = vst [vmem:[%s164 + $0x20] sm:$0xf] %v702
        %767 = vst [vmem:[%s164 + $0x24] sm:$0xf] %v703
        %768 = vst [vmem:[%s164 + $0x28] sm:$0xf] %v704
        %769 = vst [vmem:[%s164 + $0x2c] sm:$0xf] %v705
        %770 = vst [vmem:[%s164 + $0x30] sm:$0xf] %v706
        %771 = vst [vmem:[%s164 + $0x34] sm:$0xf] %v707
        %772 = vst [vmem:[%s164 + $0x38] sm:$0xf] %v708
        %773 = vst [vmem:[%s164 + $0x3c] sm:$0xf] %v709
        %774 = vst [vmem:[%s164 + $0x40] sm:$0xf] %v710
        %775 = vst [vmem:[%s164 + $0x44] sm:$0xf] %v711
        %776 = vst [vmem:[%s164 + $0x48] sm:$0xf] %v712
        %777 = vst [vmem:[%s164 + $0x4c] sm:$0xf] %v713
        %778 = vst [vmem:[%s164 + $0x50] sm:$0xf] %v714
        %779 = vst [vmem:[%s164 + $0x54] sm:$0xf] %v715
        %780 = vst [vmem:[%s164 + $0x58] sm:$0xf] %v716
        %781 = vst [vmem:[%s164 + $0x5c] sm:$0xf] %v717
        %782 = vst [vmem:[%s164 + $0x60] sm:$0xf] %v718
        %783 = vst [vmem:[%s164 + $0x64] sm:$0xf] %v719
        %784 = vst [vmem:[%s164 + $0x68] sm:$0xf] %v720
        %785 = vst [vmem:[%s164 + $0x6c] sm:$0xf] %v721
        %786 = vst [vmem:[%s164 + $0x70] sm:$0xf] %v722
        %787 = vst [vmem:[%s164 + $0x74] sm:$0xf] %v723
        %788 = vst [vmem:[%s164 + $0x78] sm:$0xf] %v724
        %789 = vst [vmem:[%s164 + $0x7c] sm:$0xf] %v725
        %s790 = sand.u32 %s93, 1
        %s791 = scalar_lea.sflag [#allocation3], %s790
        %s792 = sand.u32 %s93, 1
        %s793 = smul.addr %s792, 128
        %s794 = scalar_lea.vmem [#allocation2], %s793
        // Predicated region
        $region33: #{tpu_custom_call.1} parent=31 // pred_check
          %p795 = pneg %p103
        $region34: #{tpu_custom_call.1} parent=31 // pred_check_branch
          %797 = sbr.rel (%p795) target = $region36
        $region35: #{tpu_custom_call.1} parent=31 // pred_region
          %s798 = smul.u32 32, %s17
          %s800 = ssub.s32 2048, 2048
          %801 = vsyncadd %s791, %s800
          %s802 = smul.addr %s798, 64
          %s803 = scalar_lea.hbm %s3, %s802
          %s804 = sshll.u32 %s794, 4
          %s805 = int_to_ptr.vmem [resolvable:$true] %s804
          %810 = dma.vmem_to_hbm [thread:$0]  %s805, 2048, %s803, %s791, 64, 64, 4
        $region36: #{tpu_custom_call.1} parent=31 // pred_fallthru
          _
      $region32: #{tpu_custom_call.1} parent=5 // pred_fallthru
        _
      %p811 = scmp.le.s32.totalorder 2, %s12
      // Predicated region
      $region37: #{tpu_custom_call.1} parent=5 // pred_check
        %p812 = pneg %p811
      $region38: #{tpu_custom_call.1} parent=5 // pred_check_branch
        %814 = sbr.rel (%p812) target = $region40
      $region39: #{tpu_custom_call.1} parent=5 // pred_region
        %s815 = ssub.s32 %s12, 2
        // Predicated region
        $region41: #{tpu_custom_call.1} parent=39 // pred_check
          %p816 = pneg %p109
        $region42: #{tpu_custom_call.1} parent=39 // pred_check_branch
          %818 = sbr.rel (%p816) target = $region44
        $region43: #{tpu_custom_call.1} parent=39 // pred_region
          %s819 = sand.u32 %s94, 1
          %s820 = scalar_lea.sflag [#allocation3], %s819
          %s821 = sand.u32 %s94, 1
          %s822 = smul.addr %s821, 128
          %s823 = scalar_lea.vmem [#allocation2], %s822
          %824 = dma.done %s820, 2048
        $region44: #{tpu_custom_call.1} parent=39 // pred_fallthru
          _
      $region40: #{tpu_custom_call.1} parent=5 // pred_fallthru
        _
    $region6: #{tpu_custom_call.1} parent=1 // loop_footer
      %s16 = sadd.s32 1, %s12
    $region7: #{tpu_custom_call.1} parent=1 // loop_footer_branch
      %11 = sbr.rel target = $region3
    $region8: #{tpu_custom_call.1} parent=1 // loop_exit
      _
    %825 = vsyncpa [#allocation3], 1
    %s826 = scalar_lea.sflag [#allocation3], 1
    %827 = vsyncpa %s826, 1

</llo_original>
